<compile_context>
chip_gen: v6e
topology: v6e:2x2x1
jax: 0.10.0
libtpu: 0.0.40
codegen_flags: <defaults>
</compile_context>

<pallas_src>
import jax
import jax.numpy as jnp
from jax.experimental import pallas as pl
from jax.experimental.pallas import tpu as pltpu

_LANE = 128


def _rup(v, m):
    return ((v + m - 1) // m) * m


# ---------------------------------------------------------------------------
# Kernel 1: small feature GEMM with folded row-scaling  out = d_row * (X @ W1)
# ---------------------------------------------------------------------------
def _xw_scale_kernel(x_ref, w_ref, d_ref, out_ref):
    xw = jnp.dot(x_ref[...], w_ref[...], preferred_element_type=jnp.float32)
    out_ref[...] = (xw * d_ref[...]).astype(out_ref.dtype)


# ---------------------------------------------------------------------------
# Pass 1: acc = (A+I) @ (d*XW1); finalize:
#         H = relu(d_row*acc + b1); store d_row * (H @ [Wmu|Wlogstd])
# ---------------------------------------------------------------------------
def _agg1_kernel(adj_ref, y_ref, d_ref, b1_ref, w2_ref, out_ref, acc_ref):
    @pl.when(pl.program_id(1) == 0)
    def _():
        acc_ref[...] = jnp.zeros_like(acc_ref)

    # int8 adjacency tile -> bf16 just before the MXU; no other per-tile work.
    acc_ref[...] += jnp.dot(
        adj_ref[...].astype(jnp.bfloat16), y_ref[...],
        preferred_element_type=jnp.float32,
    )

    @pl.when(pl.program_id(1) == pl.num_programs(1) - 1)
    def _():
        d = d_ref[...]
        h = jnp.maximum(acc_ref[...] * d + b1_ref[...], 0.0)
        hw2 = jnp.dot(h.astype(jnp.bfloat16), w2_ref[...],
                      preferred_element_type=jnp.float32)
        out_ref[...] = (hw2 * d).astype(out_ref.dtype)


# ---------------------------------------------------------------------------
# Pass 2: acc = (A+I) @ (d*HW2); finalize: store d_row*acc + [b_mu|b_logstd]
# ---------------------------------------------------------------------------
def _agg2_kernel(adj_ref, y_ref, d_ref, b2_ref, out_ref, acc_ref):
    @pl.when(pl.program_id(1) == 0)
    def _():
        acc_ref[...] = jnp.zeros_like(acc_ref)

    acc_ref[...] += jnp.dot(
        adj_ref[...].astype(jnp.bfloat16), y_ref[...],
        preferred_element_type=jnp.float32,
    )

    @pl.when(pl.program_id(1) == pl.num_programs(1) - 1)
    def _():
        out_ref[...] = (acc_ref[...] * d_ref[...] + b2_ref[...]).astype(out_ref.dtype)


# ---------------------------------------------------------------------------
# Wrapper
# ---------------------------------------------------------------------------
def variational_gcn_encoder(x, edge_index, params, *, tm=512, tk=2048):
    """x: (N, Cin) f32; edge_index: (2, E) int32; params: dict of weights/biases."""
    N, cin = x.shape
    hid = params["w1"].shape[1]
    out_c = params["w_mu"].shape[1]
    oc2 = 2 * out_c

    # --- tile / padding bookkeeping -----------------------------------------
    tm = max(_LANE, (int(tm) // _LANE) * _LANE)
    tk = max(_LANE, (int(tk) // _LANE) * _LANE)
    n128 = _rup(N, _LANE)
    tk = min(tk, n128)                 # reduction/lane tile, multiple of 128
    n_pad = _rup(N, tk)                # node count padded to a tk multiple
    tm = min(tm, n_pad)
    while n_pad % tm != 0:             # largest 128-multiple dividing n_pad
        tm -= _LANE

    cin_p = _rup(cin, _LANE)
    hid_p = _rup(hid, _LANE)
    oc2_p = _rup(oc2, _LANE)

    # --- glue (plain JAX): ONE dense INT8 adjacency (A + I); degrees via an
    #     O(E) scatter-add (no extra N^2 read) -------------------------------
    src, dst = edge_index[0], edge_index[1]
    loops = jnp.arange(N, dtype=edge_index.dtype)
    rows = jnp.concatenate([dst, loops])
    cols = jnp.concatenate([src, loops])
    adj = jnp.zeros((n_pad, n_pad), jnp.int8).at[rows, cols].set(1)
    deg = jnp.zeros((n_pad,), jnp.float32).at[rows].add(1.0)
    d = jnp.where(deg > 0, jax.lax.rsqrt(deg), 0.0)
    d_row = d.reshape(n_pad, 1)                       # f32, (n_pad, 1)

    # --- zero-pad features / weights to lane-dense shapes --------------------
    x_p = jnp.zeros((n_pad, cin_p), jnp.bfloat16).at[:N, :cin].set(
        x.astype(jnp.bfloat16))
    w1_p = jnp.zeros((cin_p, hid_p), jnp.bfloat16).at[:cin, :hid].set(
        params["w1"].astype(jnp.bfloat16))
    b1_p = jnp.zeros((1, hid_p), jnp.float32).at[:, :hid].set(
        params["b1"].reshape(1, hid))
    # pack mu / logstd into a single lane-dense second-layer GEMM
    w2 = jnp.concatenate([params["w_mu"], params["w_logstd"]], axis=1)
    w2_p = jnp.zeros((hid_p, oc2_p), jnp.bfloat16).at[:hid, :oc2].set(
        w2.astype(jnp.bfloat16))
    b2 = jnp.concatenate([params["b_mu"].reshape(1, -1),
                          params["b_logstd"].reshape(1, -1)], axis=1)
    b2_p = jnp.zeros((1, oc2_p), jnp.float32).at[:, :oc2].set(b2)

    n_row_tiles = n_pad // tm
    n_k_tiles = n_pad // tk
    grid2d = (n_row_tiles, n_k_tiles)

    # --- kernel 1: XW1 = d_row * (X @ W1) (hoisted out of the adj loop) ------
    xw1 = pl.pallas_call(
        _xw_scale_kernel,
        out_shape=jax.ShapeDtypeStruct((n_pad, hid_p), jnp.bfloat16),
        grid=(n_row_tiles,),
        in_specs=[pl.BlockSpec((tm, cin_p), lambda i: (i, 0)),
                  pl.BlockSpec((cin_p, hid_p), lambda i: (0, 0)),
                  pl.BlockSpec((tm, 1), lambda i: (i, 0))],
        out_specs=pl.BlockSpec((tm, hid_p), lambda i: (i, 0)),
        compiler_params=pltpu.CompilerParams(
            dimension_semantics=("parallel",)),
    )(x_p, w1_p, d_row)

    # --- kernel 2: stream adj (1st time) ->
    #     HW2 = d_row * (relu(d_row*((A+I)@XW1) + b1) @ [Wmu|Wlogstd]) --------
    hw2 = pl.pallas_call(
        _agg1_kernel,
        out_shape=jax.ShapeDtypeStruct((n_pad, oc2_p), jnp.bfloat16),
        grid=grid2d,
        in_specs=[pl.BlockSpec((tm, tk), lambda i, k: (i, k)),        # adj tile (int8)
                  pl.BlockSpec((tk, hid_p), lambda i, k: (k, 0)),     # scaled XW1 rows
                  pl.BlockSpec((tm, 1), lambda i, k: (i, 0)),         # d_row (finalize)
                  pl.BlockSpec((1, hid_p), lambda i, k: (0, 0)),      # b1
                  pl.BlockSpec((hid_p, oc2_p), lambda i, k: (0, 0))], # W2 packed
        out_specs=pl.BlockSpec((tm, oc2_p), lambda i, k: (i, 0)),
        scratch_shapes=[pltpu.VMEM((tm, hid_p), jnp.float32)],
        compiler_params=pltpu.CompilerParams(
            dimension_semantics=("parallel", "arbitrary")),
    )(adj, xw1, d_row, b1_p, w2_p)

    # --- kernel 3: stream adj (2nd time) -> OUT = d_row*((A+I)@HW2) + b2 -----
    out = pl.pallas_call(
        _agg2_kernel,
        out_shape=jax.ShapeDtypeStruct((n_pad, oc2_p), jnp.float32),
        grid=grid2d,
        in_specs=[pl.BlockSpec((tm, tk), lambda i, k: (i, k)),
                  pl.BlockSpec((tk, oc2_p), lambda i, k: (k, 0)),
                  pl.BlockSpec((tm, 1), lambda i, k: (i, 0)),
                  pl.BlockSpec((1, oc2_p), lambda i, k: (0, 0))],
        out_specs=pl.BlockSpec((tm, oc2_p), lambda i, k: (i, 0)),
        scratch_shapes=[pltpu.VMEM((tm, oc2_p), jnp.float32)],
        compiler_params=pltpu.CompilerParams(
            dimension_semantics=("parallel", "arbitrary")),
    )(adj, hw2, d_row, b2_p)

    mu = out[:N, :out_c]
    logstd = out[:N, out_c:oc2]
    return mu, logstd


def init_params(key, in_channels, out_channels):
    hid = 2 * out_channels
    k1, k2, k3 = jax.random.split(key, 3)

    def glorot(k, shape):
        fan_in, fan_out = shape
        lim = jnp.sqrt(6.0 / (fan_in + fan_out))
        return jax.random.uniform(k, shape, jnp.float32, -lim, lim)

    return {
        "w1": glorot(k1, (in_channels, hid)),
        "b1": jnp.zeros((1, hid), jnp.float32),
        "w_mu": glorot(k2, (hid, out_channels)),
        "b_mu": jnp.zeros((1, out_channels), jnp.float32),
        "w_logstd": glorot(k3, (hid, out_channels)),
        "b_logstd": jnp.zeros((1, out_channels), jnp.float32),
    }


def reference_encoder(x, edge_index, params):
    """Pure-JAX f32 reference for correctness checking."""
    N = x.shape[0]
    src, dst = edge_index[0], edge_index[1]
    adj = jnp.zeros((N, N), jnp.float32).at[dst, src].set(1.0)
    adj = adj + jnp.eye(N, dtype=jnp.float32)
    deg = jnp.sum(adj, axis=1)
    d = jnp.where(deg > 0, 1.0 / jnp.sqrt(deg), 0.0)
    a_hat = d[:, None] * adj * d[None, :]

    h = jnp.maximum(a_hat @ (x @ params["w1"]) + params["b1"], 0.0)
    mu = a_hat @ (h @ params["w_mu"]) + params["b_mu"]
    ls = a_hat @ (h @ params["w_logstd"]) + params["b_logstd"]
    return mu, ls


if __name__ == "__main__":
    key = jax.random.PRNGKey(0)
    k_x, k_p = jax.random.split(key)

    N = 200            # nodes (padded internally to 256)
    in_channels = 16
    out_channels = 8   # hidden = 2 * out_channels = 16

    x = jax.random.normal(k_x, (N, in_channels), jnp.float32)

    # deterministic undirected ring graph: i <-> (i+1) % N
    src = jnp.arange(N, dtype=jnp.int32)
    dst = (src + 1) % N
    edge_index = jnp.stack([jnp.concatenate([src, dst]),
                            jnp.concatenate([dst, src])], axis=0)

    params = init_params(k_p, in_channels, out_channels)

    # small tiles so the demo graph still exercises a real (2, 2) adj grid;
    # large graphs should use the (tm=512, tk=2048) defaults.
    mu, logstd = variational_gcn_encoder(x, edge_index, params, tm=128, tk=128)
    jax.block_until_ready((mu, logstd))

    mu_ref, ls_ref = reference_encoder(x, edge_index, params)
    # bf16 feature/weight path -> compare against the f32 reference with a
    # bf16-appropriate tolerance.
    assert jnp.allclose(mu, mu_ref, atol=5e-2, rtol=5e-2), "mu mismatch"
    assert jnp.allclose(logstd, ls_ref, atol=5e-2, rtol=5e-2), "logstd mismatch"

    print("KERNEL_OK")
</pallas_src>

<mosaic_0001>
module attributes {stable_mosaic.version = 11 : i64} {
  func.func @_xw_scale_kernel(%arg0: i32, %arg1: memref<128x128xbf16, #tpu.memory_space<vmem>>, %arg2: memref<128x128xbf16, #tpu.memory_space<vmem>>, %arg3: memref<128x1xf32, #tpu.memory_space<vmem>>, %arg4: memref<128x128xbf16, #tpu.memory_space<vmem>>) attributes {dimension_semantics = [#tpu.dimension_semantics<parallel>], iteration_bounds = array<i64: 2>, scalar_prefetch = 0 : i64, scratch_operands = 0 : i64, tpu.core_type = #tpu.core_type<tc>, window_params = [{transform_indices = @transform_0, window_bounds = array<i64: 128, 128>}, {pipeline_mode = #tpu.pipeline_mode<synchronous>, transform_indices = @transform_1, window_bounds = array<i64: 128, 128>}, {transform_indices = @transform_2, window_bounds = array<i64: 128, 1>}, {transform_indices = @transform_3, window_bounds = array<i64: 128, 128>}]} {
    %c0 = arith.constant 0 : index
    %c0_0 = arith.constant 0 : index
    %0 = vector.load %arg1[%c0, %c0_0] : memref<128x128xbf16, #tpu.memory_space<vmem>>, vector<128x128xbf16>
    %c0_1 = arith.constant 0 : index
    %c0_2 = arith.constant 0 : index
    %1 = vector.load %arg2[%c0_1, %c0_2] : memref<128x128xbf16, #tpu.memory_space<vmem>>, vector<128x128xbf16>
    %cst = arith.constant dense<0.000000e+00> : vector<128x128xf32>
    %2 = tpu.matmul %0, %1, %cst {dimension_numbers = #tpu.dot_dimension_numbers<[1], [0], [0], [1], [0, 0, 1, 1], [], []>} : vector<128x128xbf16>, vector<128x128xbf16>, vector<128x128xf32> -> vector<128x128xf32>
    %c0_3 = arith.constant 0 : index
    %c0_4 = arith.constant 0 : index
    %3 = vector.load %arg3[%c0_3, %c0_4] : memref<128x1xf32, #tpu.memory_space<vmem>>, vector<128x1xf32>
    %4 = vector.broadcast %3 : vector<128x1xf32> to vector<128x128xf32>
    %5 = arith.mulf %2, %4 : vector<128x128xf32>
    %6 = arith.truncf %5 : vector<128x128xf32> to vector<128x128xbf16>
    %c0_5 = arith.constant 0 : index
    %c0_6 = arith.constant 0 : index
    %7 = vector.load %arg4[%c0_5, %c0_6] : memref<128x128xbf16, #tpu.memory_space<vmem>>, vector<128x128xbf16>
    tpu.vector_store %arg4[%c0_5, %c0_6], %6 {strides = array<i32>} : memref<128x128xbf16, #tpu.memory_space<vmem>>, vector<128x128xbf16>,
    return
  }
  func.func @transform_0(%arg0: i32) -> (i32, i32) {
    %c0_i32 = arith.constant 0 : i32
    %c0_i32_0 = arith.constant 0 : i32
    return %arg0, %c0_i32 : i32, i32
  }
  func.func @transform_1(%arg0: i32) -> (i32, i32) {
    %c0_i32 = arith.constant 0 : i32
    %c0_i32_0 = arith.constant 0 : i32
    %c0_i32_1 = arith.constant 0 : i32
    return %c0_i32, %c0_i32_0 : i32, i32
  }
  func.func @transform_2(%arg0: i32) -> (i32, i32) {
    %c0_i32 = arith.constant 0 : i32
    %c0_i32_0 = arith.constant 0 : i32
    return %arg0, %c0_i32 : i32, i32
  }
  func.func @transform_3(%arg0: i32) -> (i32, i32) {
    %c0_i32 = arith.constant 0 : i32
    %c0_i32_0 = arith.constant 0 : i32
    return %arg0, %c0_i32 : i32, i32
  }
}

</mosaic_0001>

<llo_original>
// kernel: tpu_custom_call.1
$region0: #{tpu_custom_call.1}
  #allocation0 [shape = 'u32[]', space=smem, size = 0x4, offset = 0x4, fixed_abs, tag = 'smem constant byte address 0x4 - core index']
  #allocation1 [shape = 'u32[144,128]{1,0:T(1,128)}', space=vmem, size = 0x12000, scoped, tag = 'internal scratch']
  %s0 = inlined_call_operand.vmem [shape: bf16[256,128], index: 0, kind: input, shape index: {}]
  %s1 = inlined_call_operand.vmem [shape: bf16[128,128], index: 1, kind: input, shape index: {}]
  %s2 = inlined_call_operand.vmem [shape: f32[256,1], index: 2, kind: input, shape index: {}]
  %s3 = inlined_call_operand.hbm [shape: bf16[256,128], index: 3, kind: output, shape index: {}]
  %s4 = sld [smem:[#allocation0]]
  $region45: #{tpu_custom_call.1} parent=0
    _
  %s6 = ssub.s32 1, %s4
  %s7 = scalar_select 0, %s6, %s4
  $region1: #{tpu_custom_call.1} parent=0
    #allocation2 [shape = 'u8[65536]{0}', space=vmem, size = 0x10000, scoped, tag = 'output window, operand 0']
    #allocation3 [shape = 's32[2]{0}', space=sflag, size = 0x8, scoped, tag = 'scoped memory for tpu_custom_call.1']
    %8 = vsyncpa [#allocation3], 0
    %s9 = scalar_lea.sflag [#allocation3], 1
    %10 = vsyncpa %s9, 0
    loop: start=0, step=1, limit=4
    $region2: #{tpu_custom_call.1} parent=1 // loop_pre_header
      _
    $region3: #{tpu_custom_call.1} parent=1 // loop_header
      %s12 = sphi 0, %s16
      %p13 = scmp.ge.s32.totalorder %s12, 4
      %s22 = sphi 0, %s24
      %s25 = sphi 0, %s22
      %s26 = sphi 0, %s25
      %s42 = sphi 0, %s26
      %s46 = sphi 0, %s46
      %s48 = sphi 0, %s46
      %s49 = sphi 0, %s48
      %s63 = sphi 0, %s49
      %s69 = sphi 0, %s71
      %s72 = sphi 0, %s69
      %s73 = sphi 0, %s72
      %s89 = sphi 0, %s73
      %s95 = sphi 0, %s97
      %s98 = sphi 0, %s95
      %s99 = sphi 0, %s98
      %s115 = sphi 0, %s99
    $region4: #{tpu_custom_call.1} parent=1 // loop_header_branch
      %15 = sbr.rel (%p13) target = $region8
    $region5: #{tpu_custom_call.1} parent=1 // loop_body
      %s17 = ssub.s32 %s12, 1
      %s18 = ssub.s32 %s12, 2
      %s19 = sadd.s32 %s12, 1
      %s20 = ssub.s32 %s12, %s19
      %p21 = scmp.eq.s32.totalorder %s20, 0
      %s23 = sadd.s32 %s22, 1
      %s24 = scalar_select %p21, %s22, %s23
      %p27 = pneg %p21
      %p28 = scmp.eq.s32.totalorder %s12, 1
      %p29 = por %p27, %p28
      %p30 = scmp.ne.s32.totalorder %s22, %s25
      %p31 = scmp.eq.s32.totalorder %s12, 0
      %p32 = por %p30, %p31
      %p33 = scmp.ne.s32.totalorder %s22, %s25
      %p34 = scmp.eq.s32.totalorder %s17, 1
      %p35 = por %p33, %p34
      %p36 = scmp.ne.s32.totalorder %s25, %s26
      %p37 = scmp.eq.s32.totalorder %s17, 0
      %p38 = por %p36, %p37
      %p39 = scmp.ne.s32.totalorder %s25, %s26
      %p40 = scmp.eq.s32.totalorder %s18, 1
      %p41 = por %p39, %p40
      %p43 = scmp.ne.s32.totalorder %s26, %s42
      %p44 = scmp.eq.s32.totalorder %s18, 0
      %p45 = por %p43, %p44
      %s47 = sadd.s32 %s46, 1
      %p50 = scmp.eq.s32.totalorder %s12, 1
      %p51 = scmp.ne.s32.totalorder %s46, %s48
      %p52 = scmp.eq.s32.totalorder %s12, 0
      %p53 = por %p51, %p52
      %p54 = scmp.ne.s32.totalorder %s46, %s48
      %p55 = scmp.eq.s32.totalorder %s17, 1
      %p56 = por %p54, %p55
      %p57 = scmp.ne.s32.totalorder %s48, %s49
      %p58 = scmp.eq.s32.totalorder %s17, 0
      %p59 = por %p57, %p58
      %p60 = scmp.ne.s32.totalorder %s48, %s49
      %p61 = scmp.eq.s32.totalorder %s18, 1
      %p62 = por %p60, %p61
      %p64 = scmp.ne.s32.totalorder %s49, %s63
      %p65 = scmp.eq.s32.totalorder %s18, 0
      %p66 = por %p64, %p65
      %s67 = ssub.s32 %s12, %s19
      %p68 = scmp.eq.s32.totalorder %s67, 0
      %s70 = sadd.s32 %s69, 1
      %s71 = scalar_select %p68, %s69, %s70
      %p74 = pneg %p68
      %p75 = scmp.eq.s32.totalorder %s12, 1
      %p76 = por %p74, %p75
      %p77 = scmp.ne.s32.totalorder %s69, %s72
      %p78 = scmp.eq.s32.totalorder %s12, 0
      %p79 = por %p77, %p78
      %p80 = scmp.ne.s32.totalorder %s69, %s72
      %p81 = scmp.eq.s32.totalorder %s17, 1
      %p82 = por %p80, %p81
      %p83 = scmp.ne.s32.totalorder %s72, %s73
      %p84 = scmp.eq.s32.totalorder %s17, 0
      %p85 = por %p83, %p84
      %p86 = scmp.ne.s32.totalorder %s72, %s73
      %p87 = scmp.eq.s32.totalorder %s18, 1
      %p88 = por %p86, %p87
      %p90 = scmp.ne.s32.totalorder %s73, %s89
      %p91 = scmp.eq.s32.totalorder %s18, 0
      %p92 = por %p90, %p91
      %s93 = ssub.s32 %s12, %s19
      %p94 = scmp.eq.s32.totalorder %s93, 0
      %s96 = sadd.s32 %s95, 1
      %s97 = scalar_select %p94, %s95, %s96
      %p100 = pneg %p94
      %p101 = scmp.eq.s32.totalorder %s12, 1
      %p102 = por %p100, %p101
      %p103 = scmp.ne.s32.totalorder %s95, %s98
      %p104 = scmp.eq.s32.totalorder %s12, 0
      %p105 = por %p103, %p104
      %p106 = scmp.ne.s32.totalorder %s95, %s98
      %p107 = scmp.eq.s32.totalorder %s17, 1
      %p108 = por %p106, %p107
      %p109 = scmp.ne.s32.totalorder %s98, %s99
      %p110 = scmp.eq.s32.totalorder %s17, 0
      %p111 = por %p109, %p110
      %p112 = scmp.ne.s32.totalorder %s98, %s99
      %p113 = scmp.eq.s32.totalorder %s18, 1
      %p114 = por %p112, %p113
      %p116 = scmp.ne.s32.totalorder %s99, %s115
      %p117 = scmp.eq.s32.totalorder %s18, 0
      %p118 = por %p116, %p117
      %p119 = scmp.le.s32.totalorder 1, %s12
      %p120 = scmp.lt.s32.totalorder %s12, 3
      %p121 = pnand %p119, %p120
      %p122 = pneg %p121
      // Predicated region
      $region9: #{tpu_custom_call.1} parent=5 // pred_check
        _
      $region10: #{tpu_custom_call.1} parent=5 // pred_check_branch
        %124 = sbr.rel (%p121) target = $region12
      $region11: #{tpu_custom_call.1} parent=5 // pred_region
        %s125 = ssub.s32 %s12, 1
        // Predicated region
        $region13: #{tpu_custom_call.1} parent=11 // pred_check
          %p126 = pneg %p59
        $region14: #{tpu_custom_call.1} parent=11 // pred_check_branch
          %128 = sbr.rel (%p126) target = $region16
        $region15: #{tpu_custom_call.1} parent=11 // pred_region
          _
        $region16: #{tpu_custom_call.1} parent=11 // pred_fallthru
          _
      $region12: #{tpu_custom_call.1} parent=5 // pred_fallthru
        _
      %p129 = scmp.lt.s32.totalorder %s12, 2
      // Predicated region
      $region17: #{tpu_custom_call.1} parent=5 // pred_check
        %p130 = pneg %p129
      $region18: #{tpu_custom_call.1} parent=5 // pred_check_branch
        %132 = sbr.rel (%p130) target = $region20
      $region19: #{tpu_custom_call.1} parent=5 // pred_region
        // Predicated region
        $region21: #{tpu_custom_call.1} parent=19 // pred_check
          %p133 = pneg %p32
        $region22: #{tpu_custom_call.1} parent=19 // pred_check_branch
          %135 = sbr.rel (%p133) target = $region24
        $region23: #{tpu_custom_call.1} parent=19 // pred_region
          %s136 = smul.u32 16, %s12
          %p137 = scmp.lt.s32.totalorder %s136, 31
          %s138 = scalar_select %p137, %s136, 31
          %s139 = smul.addr %s138, 4
          %s140 = scalar_lea.vmem %s0, %s139
          %s141 = smul.u32 16, %s12
        $region24: #{tpu_custom_call.1} parent=19 // pred_fallthru
          _
        // Predicated region
        $region25: #{tpu_custom_call.1} parent=19 // pred_check
          %p142 = pneg %p79
        $region26: #{tpu_custom_call.1} parent=19 // pred_check_branch
          %144 = sbr.rel (%p142) target = $region28
        $region27: #{tpu_custom_call.1} parent=19 // pred_region
          %s145 = smul.u32 16, %s12
          %p146 = scmp.lt.s32.totalorder %s145, 31
          %s147 = scalar_select %p146, %s145, 31
          %s148 = smul.addr %s147, 8
          %s149 = scalar_lea.vmem %s2, %s148
          %s150 = smul.u32 16, %s12
        $region28: #{tpu_custom_call.1} parent=19 // pred_fallthru
          _
      $region20: #{tpu_custom_call.1} parent=5 // pred_fallthru
        _
      %p151 = scmp.le.s32.totalorder 1, %s12
      %p152 = scmp.lt.s32.totalorder %s12, 3
      %p153 = pnand %p151, %p152
      %p154 = pneg %p153
      // Predicated region
      $region29: #{tpu_custom_call.1} parent=5 // pred_check
        _
      $region30: #{tpu_custom_call.1} parent=5 // pred_check_branch
        %156 = sbr.rel (%p153) target = $region32
      $region31: #{tpu_custom_call.1} parent=5 // pred_region
        %s157 = ssub.s32 %s12, 1
        %s158 = smul.u32 16, %s17
        %p159 = scmp.lt.s32.totalorder %s158, 31
        %s160 = scalar_select %p159, %s158, 31
        %s161 = smul.addr %s160, 4
        %s162 = scalar_lea.vmem %s0, %s161
        %p163 = pneg %p38
        %p164 = pneg %p35
        %p165 = pneg %p59
        %p166 = pneg %p56
        %s167 = smul.u32 16, %s17
        %p168 = scmp.lt.s32.totalorder %s167, 31
        %s169 = scalar_select %p168, %s167, 31
        %s170 = smul.addr %s169, 8
        %s171 = scalar_lea.vmem %s2, %s170
        %p172 = pneg %p85
        %p173 = pneg %p82
        %p174 = pneg %p111
        %p175 = pneg %p108
        %s176 = sand.u32 %s98, 1
        %s177 = scalar_lea.sflag [#allocation3], %s176
        %s178 = sand.u32 %s98, 1
        %s179 = smul.addr %s178, 64
        %s180 = scalar_lea.vmem [#allocation2], %s179
        %s181 = smul.u32 16, %s17
        %p182 = scmp.lt.s32.totalorder %s181, 31
        %s183 = scalar_select %p182, %s181, 31
        %s184 = smul.addr %s183, 4
        %s185 = scalar_lea.vmem %s0, %s184
        %s186 = smul.u32 16, %s17
        %s187 = smul.u32 16, %s17
        %p188 = scmp.lt.s32.totalorder %s187, 31
        %s189 = scalar_select %p188, %s187, 31
        %s190 = smul.addr %s189, 8
        %s191 = scalar_lea.vmem %s2, %s190
        %s192 = smul.u32 16, %s17
        %s193 = smul.u32 16, %s17
        %v195 = vld [vmem:[%s185] sm:$0xf]
        %v196 = vld [vmem:[%s185 + $0x4] sm:$0xf]
        %v197 = vld [vmem:[%s185 + $0x8] sm:$0xf]
        %v198 = vld [vmem:[%s185 + $0xc] sm:$0xf]
        %v199 = vld [vmem:[%s185 + $0x10] sm:$0xf]
        %v200 = vld [vmem:[%s185 + $0x14] sm:$0xf]
        %v201 = vld [vmem:[%s185 + $0x18] sm:$0xf]
        %v202 = vld [vmem:[%s185 + $0x1c] sm:$0xf]
        %v203 = vld [vmem:[%s185 + $0x20] sm:$0xf]
        %v204 = vld [vmem:[%s185 + $0x24] sm:$0xf]
        %v205 = vld [vmem:[%s185 + $0x28] sm:$0xf]
        %v206 = vld [vmem:[%s185 + $0x2c] sm:$0xf]
        %v207 = vld [vmem:[%s185 + $0x30] sm:$0xf]
        %v208 = vld [vmem:[%s185 + $0x34] sm:$0xf]
        %v209 = vld [vmem:[%s185 + $0x38] sm:$0xf]
        %v210 = vld [vmem:[%s185 + $0x3c] sm:$0xf]
        %v211 = vld [vmem:[%s1] sm:$0xf]
        %v212 = vld [vmem:[%s1 + $0x4] sm:$0xf]
        %v213 = vld [vmem:[%s1 + $0x8] sm:$0xf]
        %v214 = vld [vmem:[%s1 + $0xc] sm:$0xf]
        %v215 = vld [vmem:[%s1 + $0x10] sm:$0xf]
        %v216 = vld [vmem:[%s1 + $0x14] sm:$0xf]
        %v217 = vld [vmem:[%s1 + $0x18] sm:$0xf]
        %v218 = vld [vmem:[%s1 + $0x1c] sm:$0xf]
        %v219 = vld [vmem:[%s1 + $0x20] sm:$0xf]
        %v220 = vld [vmem:[%s1 + $0x24] sm:$0xf]
        %v221 = vld [vmem:[%s1 + $0x28] sm:$0xf]
        %v222 = vld [vmem:[%s1 + $0x2c] sm:$0xf]
        %v223 = vld [vmem:[%s1 + $0x30] sm:$0xf]
        %v224 = vld [vmem:[%s1 + $0x34] sm:$0xf]
        %v225 = vld [vmem:[%s1 + $0x38] sm:$0xf]
        %v226 = vld [vmem:[%s1 + $0x3c] sm:$0xf]
        %v243 = vunpack.c.l.b16 %v195
        %v244 = vunpack.c.l.b16 %v196
        %v245 = vunpack.c.l.b16 %v197
        %v246 = vunpack.c.l.b16 %v198
        %v247 = vunpack.c.l.b16 %v199
        %v248 = vunpack.c.l.b16 %v200
        %v249 = vunpack.c.l.b16 %v201
        %v250 = vunpack.c.l.b16 %v202
        %v251 = vunpack.c.l.b16 %v203
        %v252 = vunpack.c.l.b16 %v204
        %v253 = vunpack.c.l.b16 %v205
        %v254 = vunpack.c.l.b16 %v206
        %v255 = vunpack.c.l.b16 %v207
        %v256 = vunpack.c.l.b16 %v208
        %v257 = vunpack.c.l.b16 %v209
        %v258 = vunpack.c.l.b16 %v210
        %v259 = vpack.c.b16 %v244, %v243
        %v260 = vpack.c.b16 %v246, %v245
        %v261 = vpack.c.b16 %v248, %v247
        %v262 = vpack.c.b16 %v250, %v249
        %v263 = vpack.c.b16 %v252, %v251
        %v264 = vpack.c.b16 %v254, %v253
        %v265 = vpack.c.b16 %v256, %v255
        %v266 = vpack.c.b16 %v258, %v257
        %v291 = vunpack.c.l.b16 %v211
        %v292 = vunpack.c.l.b16 %v212
        %v293 = vunpack.c.l.b16 %v213
        %v294 = vunpack.c.l.b16 %v214
        %v295 = vunpack.c.l.b16 %v215
        %v296 = vunpack.c.l.b16 %v216
        %v297 = vunpack.c.l.b16 %v217
        %v298 = vunpack.c.l.b16 %v218
        %v299 = vunpack.c.l.b16 %v219
        %v300 = vunpack.c.l.b16 %v220
        %v301 = vunpack.c.l.b16 %v221
        %v302 = vunpack.c.l.b16 %v222
        %v303 = vunpack.c.l.b16 %v223
        %v304 = vunpack.c.l.b16 %v224
        %v305 = vunpack.c.l.b16 %v225
        %v306 = vunpack.c.l.b16 %v226
        %v307 = vpack.c.b16 %v292, %v291
        %v308 = vpack.c.b16 %v294, %v293
        %v309 = vpack.c.b16 %v296, %v295
        %v310 = vpack.c.b16 %v298, %v297
        %v311 = vpack.c.b16 %v300, %v299
        %v312 = vpack.c.b16 %v302, %v301
        %v313 = vpack.c.b16 %v304, %v303
        %v314 = vpack.c.b16 %v306, %v305
        %323 = vmatprep.subr.bf16.mxu0 0
        %324 = vmatpush1.bf16.msra.mxu0 %v314
        %325 = vmatprep.subr.bf16.mxu0 0
        %326 = vmatpush1.bf16.msra.mxu0 %v313
        %327 = vmatprep.subr.bf16.mxu0 0
        %328 = vmatpush1.bf16.msra.mxu0 %v312
        %329 = vmatprep.subr.bf16.mxu0 0
        %330 = vmatpush1.bf16.msra.mxu0 %v311
        %331 = vmatprep.subr.bf16.mxu0 0
        %332 = vmatpush1.bf16.msra.mxu0 %v310
        %333 = vmatprep.subr.bf16.mxu0 0
        %334 = vmatpush1.bf16.msra.mxu0 %v309
        %335 = vmatprep.subr.bf16.mxu0 0
        %336 = vmatpush1.bf16.msra.mxu0 %v308
        %337 = vmatprep.subr.bf16.mxu0 0
        %338 = vmatpush1.bf16.msra.mxu0 %v307
        %339 = vmatprep.subr.bf16.mxu0 0
        %340 = vmatpush2.bf16.msra.mxu0 0
        %341 = vmatprep.subr.bf16.mxu0 0
        %342 = vmatpush2.bf16.msra.mxu0 0
        %343 = vmatprep.subr.bf16.mxu0 0
        %344 = vmatpush2.bf16.msra.mxu0 0
        %345 = vmatprep.subr.bf16.mxu0 0
        %346 = vmatpush2.bf16.msra.mxu0 0
        %347 = vmatprep.subr.bf16.mxu0 0
        %348 = vmatpush2.bf16.msra.mxu0 0
        %349 = vmatprep.subr.bf16.mxu0 0
        %350 = vmatpush2.bf16.msra.mxu0 0
        %351 = vmatprep.subr.bf16.mxu0 0
        %352 = vmatpush2.bf16.msra.mxu0 0
        %353 = vmatprep.subr.bf16.mxu0 0
        %354 = vmatpush2.bf16.msra.mxu0 0
        %355 = vmatprep.mubr.bf16.mxu0 0
        %356 = vmatmul.mubr.bf16.gmra.mxu0 %v259
        %v357 = vpop.f32.mrf.mxu0
        %v358 = vadd.f32 0.0, %v357
        %v359 = vpop.f32.mrf.mxu0
        %v360 = vpop.f32.mrf.mxu0
        %v361 = vadd.f32 0.0, %v360
        %v362 = vpop.f32.mrf.mxu0
        %363 = vmatprep.mubr.bf16.mxu0 0
        %364 = vmatmul.mubr.bf16.gmra.mxu0 %v260
        %v365 = vpop.f32.mrf.mxu0
        %v366 = vadd.f32 0.0, %v365
        %v367 = vpop.f32.mrf.mxu0
        %v368 = vpop.f32.mrf.mxu0
        %v369 = vadd.f32 0.0, %v368
        %v370 = vpop.f32.mrf.mxu0
        %371 = vmatprep.mubr.bf16.mxu0 0
        %372 = vmatmul.mubr.bf16.gmra.mxu0 %v261
        %v373 = vpop.f32.mrf.mxu0
        %v374 = vadd.f32 0.0, %v373
        %v375 = vpop.f32.mrf.mxu0
        %v376 = vpop.f32.mrf.mxu0
        %v377 = vadd.f32 0.0, %v376
        %v378 = vpop.f32.mrf.mxu0
        %379 = vmatprep.mubr.bf16.mxu0 0
        %380 = vmatmul.mubr.bf16.gmra.mxu0 %v262
        %v381 = vpop.f32.mrf.mxu0
        %v382 = vadd.f32 0.0, %v381
        %v383 = vpop.f32.mrf.mxu0
        %v384 = vpop.f32.mrf.mxu0
        %v385 = vadd.f32 0.0, %v384
        %v386 = vpop.f32.mrf.mxu0
        %387 = vmatprep.mubr.bf16.mxu0 0
        %388 = vmatmul.mubr.bf16.gmra.mxu0 %v263
        %v389 = vpop.f32.mrf.mxu0
        %v390 = vadd.f32 0.0, %v389
        %v391 = vpop.f32.mrf.mxu0
        %v392 = vpop.f32.mrf.mxu0
        %v393 = vadd.f32 0.0, %v392
        %v394 = vpop.f32.mrf.mxu0
        %395 = vmatprep.mubr.bf16.mxu0 0
        %396 = vmatmul.mubr.bf16.gmra.mxu0 %v264
        %v397 = vpop.f32.mrf.mxu0
        %v398 = vadd.f32 0.0, %v397
        %v399 = vpop.f32.mrf.mxu0
        %v400 = vpop.f32.mrf.mxu0
        %v401 = vadd.f32 0.0, %v400
        %v402 = vpop.f32.mrf.mxu0
        %403 = vmatprep.mubr.bf16.mxu0 0
        %404 = vmatmul.mubr.bf16.gmra.mxu0 %v265
        %v405 = vpop.f32.mrf.mxu0
        %v406 = vadd.f32 0.0, %v405
        %v407 = vpop.f32.mrf.mxu0
        %v408 = vpop.f32.mrf.mxu0
        %v409 = vadd.f32 0.0, %v408
        %v410 = vpop.f32.mrf.mxu0
        %411 = vmatprep.mubr.bf16.mxu0 0
        %412 = vmatmul.mubr.bf16.gmra.mxu0 %v266
        %v413 = vpop.f32.mrf.mxu0
        %v414 = vadd.f32 0.0, %v413
        %v415 = vpop.f32.mrf.mxu0
        %v416 = vpop.f32.mrf.mxu0
        %v417 = vadd.f32 0.0, %v416
        %v418 = vpop.f32.mrf.mxu0
        %419 = vdwg.mxu0
        %v420 = vld [vmem:[%s191] sm:$0xff]
        %v421 = vld [vmem:[%s191 + $0x8] sm:$0xff]
        %v422 = vld [vmem:[%s191 + $0x10] sm:$0xff]
        %v423 = vld [vmem:[%s191 + $0x18] sm:$0xff]
        %v424 = vld [vmem:[%s191 + $0x20] sm:$0xff]
        %v425 = vld [vmem:[%s191 + $0x28] sm:$0xff]
        %v426 = vld [vmem:[%s191 + $0x30] sm:$0xff]
        %v427 = vld [vmem:[%s191 + $0x38] sm:$0xff]
        %v428 = vld [vmem:[%s191 + $0x40] sm:$0xff]
        %v429 = vld [vmem:[%s191 + $0x48] sm:$0xff]
        %v430 = vld [vmem:[%s191 + $0x50] sm:$0xff]
        %v431 = vld [vmem:[%s191 + $0x58] sm:$0xff]
        %v432 = vld [vmem:[%s191 + $0x60] sm:$0xff]
        %v433 = vld [vmem:[%s191 + $0x68] sm:$0xff]
        %v434 = vld [vmem:[%s191 + $0x70] sm:$0xff]
        %v435 = vld [vmem:[%s191 + $0x78] sm:$0xff]
        %437 = vset.pattern.permute.xlu0 0
        %438 = vperm.xlu0 %437, %v420
        %v439 = vpop.permute.xlu0 %438
        %442 = vset.pattern.permute.xlu0 0
        %443 = vperm.xlu0 %442, %v421
        %v444 = vpop.permute.xlu0 %443
        %447 = vset.pattern.permute.xlu0 0
        %448 = vperm.xlu0 %447, %v422
        %v449 = vpop.permute.xlu0 %448
        %452 = vset.pattern.permute.xlu0 0
        %453 = vperm.xlu0 %452, %v423
        %v454 = vpop.permute.xlu0 %453
        %457 = vset.pattern.permute.xlu0 0
        %458 = vperm.xlu0 %457, %v424
        %v459 = vpop.permute.xlu0 %458
        %462 = vset.pattern.permute.xlu0 0
        %463 = vperm.xlu0 %462, %v425
        %v464 = vpop.permute.xlu0 %463
        %467 = vset.pattern.permute.xlu0 0
        %468 = vperm.xlu0 %467, %v426
        %v469 = vpop.permute.xlu0 %468
        %472 = vset.pattern.permute.xlu0 0
        %473 = vperm.xlu0 %472, %v427
        %v474 = vpop.permute.xlu0 %473
        %477 = vset.pattern.permute.xlu0 0
        %478 = vperm.xlu0 %477, %v428
        %v479 = vpop.permute.xlu0 %478
        %482 = vset.pattern.permute.xlu0 0
        %483 = vperm.xlu0 %482, %v429
        %v484 = vpop.permute.xlu0 %483
        %487 = vset.pattern.permute.xlu0 0
        %488 = vperm.xlu0 %487, %v430
        %v489 = vpop.permute.xlu0 %488
        %492 = vset.pattern.permute.xlu0 0
        %493 = vperm.xlu0 %492, %v431
        %v494 = vpop.permute.xlu0 %493
        %497 = vset.pattern.permute.xlu0 0
        %498 = vperm.xlu0 %497, %v432
        %v499 = vpop.permute.xlu0 %498
        %502 = vset.pattern.permute.xlu0 0
        %503 = vperm.xlu0 %502, %v433
        %v504 = vpop.permute.xlu0 %503
        %507 = vset.pattern.permute.xlu0 0
        %508 = vperm.xlu0 %507, %v434
        %v509 = vpop.permute.xlu0 %508
        %512 = vset.pattern.permute.xlu0 0
        %513 = vperm.xlu0 %512, %v435
        %v514 = vpop.permute.xlu0 %513
        %v516 = vmul.f32 %v358, %v439
        %v517 = vmul.f32 %v361, %v444
        %v518 = vmul.f32 %v366, %v449
        %v519 = vmul.f32 %v369, %v454
        %v520 = vmul.f32 %v374, %v459
        %v521 = vmul.f32 %v377, %v464
        %v522 = vmul.f32 %v382, %v469
        %v523 = vmul.f32 %v385, %v474
        %v524 = vmul.f32 %v390, %v479
        %v525 = vmul.f32 %v393, %v484
        %v526 = vmul.f32 %v398, %v489
        %v527 = vmul.f32 %v401, %v494
        %v528 = vmul.f32 %v406, %v499
        %v529 = vmul.f32 %v409, %v504
        %v530 = vmul.f32 %v414, %v509
        %v531 = vmul.f32 %v417, %v514
        %v532 = vpack.c.bf16 %v517, %v516
        %v533 = vpack.c.bf16 %v519, %v518
        %v534 = vpack.c.bf16 %v521, %v520
        %v535 = vpack.c.bf16 %v523, %v522
        %v536 = vpack.c.bf16 %v525, %v524
        %v537 = vpack.c.bf16 %v527, %v526
        %v538 = vpack.c.bf16 %v529, %v528
        %v539 = vpack.c.bf16 %v531, %v530
        %v548 = vunpack.c.l.b16 %v532
        %v549 = vunpack.c.h.b16 %v532
        %v550 = vunpack.c.l.b16 %v533
        %v551 = vunpack.c.h.b16 %v533
        %v552 = vunpack.c.l.b16 %v534
        %v553 = vunpack.c.h.b16 %v534
        %v554 = vunpack.c.l.b16 %v535
        %v555 = vunpack.c.h.b16 %v535
        %v556 = vunpack.c.l.b16 %v536
        %v557 = vunpack.c.h.b16 %v536
        %v558 = vunpack.c.l.b16 %v537
        %v559 = vunpack.c.h.b16 %v537
        %v560 = vunpack.c.l.b16 %v538
        %v561 = vunpack.c.h.b16 %v538
        %v562 = vunpack.c.l.b16 %v539
        %v563 = vunpack.c.h.b16 %v539
        %v564 = vpack.c.b16 %v548, %v548
        %v565 = vpack.c.b16 %v549, %v549
        %v566 = vpack.c.b16 %v550, %v550
        %v567 = vpack.c.b16 %v551, %v551
        %v568 = vpack.c.b16 %v552, %v552
        %v569 = vpack.c.b16 %v553, %v553
        %v570 = vpack.c.b16 %v554, %v554
        %v571 = vpack.c.b16 %v555, %v555
        %v572 = vpack.c.b16 %v556, %v556
        %v573 = vpack.c.b16 %v557, %v557
        %v574 = vpack.c.b16 %v558, %v558
        %v575 = vpack.c.b16 %v559, %v559
        %v576 = vpack.c.b16 %v560, %v560
        %v577 = vpack.c.b16 %v561, %v561
        %v578 = vpack.c.b16 %v562, %v562
        %v579 = vpack.c.b16 %v563, %v563
        %596 = vst [vmem:[%s180] sm:$0xf] %v564
        %597 = vst [vmem:[%s180 + $0x4] sm:$0xf] %v565
        %598 = vst [vmem:[%s180 + $0x8] sm:$0xf] %v566
        %599 = vst [vmem:[%s180 + $0xc] sm:$0xf] %v567
        %600 = vst [vmem:[%s180 + $0x10] sm:$0xf] %v568
        %601 = vst [vmem:[%s180 + $0x14] sm:$0xf] %v569
        %602 = vst [vmem:[%s180 + $0x18] sm:$0xf] %v570
        %603 = vst [vmem:[%s180 + $0x1c] sm:$0xf] %v571
        %604 = vst [vmem:[%s180 + $0x20] sm:$0xf] %v572
        %605 = vst [vmem:[%s180 + $0x24] sm:$0xf] %v573
        %606 = vst [vmem:[%s180 + $0x28] sm:$0xf] %v574
        %607 = vst [vmem:[%s180 + $0x2c] sm:$0xf] %v575
        %608 = vst [vmem:[%s180 + $0x30] sm:$0xf] %v576
        %609 = vst [vmem:[%s180 + $0x34] sm:$0xf] %v577
        %610 = vst [vmem:[%s180 + $0x38] sm:$0xf] %v578
        %611 = vst [vmem:[%s180 + $0x3c] sm:$0xf] %v579
        %s612 = sand.u32 %s98, 1
        %s613 = scalar_lea.sflag [#allocation3], %s612
        %s614 = sand.u32 %s98, 1
        %s615 = smul.addr %s614, 64
        %s616 = scalar_lea.vmem [#allocation2], %s615
        // Predicated region
        $region33: #{tpu_custom_call.1} parent=31 // pred_check
          %p617 = pneg %p108
        $region34: #{tpu_custom_call.1} parent=31 // pred_check_branch
          %619 = sbr.rel (%p617) target = $region36
        $region35: #{tpu_custom_call.1} parent=31 // pred_region
          %s620 = smul.u32 16, %s17
          %s622 = ssub.s32 1024, 1024
          %623 = vsyncadd %s613, %s622
          %s624 = smul.addr %s620, 64
          %s625 = scalar_lea.hbm %s3, %s624
          %s626 = sshll.u32 %s616, 4
          %s627 = int_to_ptr.vmem [resolvable:$true] %s626
          %632 = dma.vmem_to_hbm [thread:$0]  %s627, 1024, %s625, %s613, 64, 64, 4
        $region36: #{tpu_custom_call.1} parent=31 // pred_fallthru
          _
      $region32: #{tpu_custom_call.1} parent=5 // pred_fallthru
        _
      %p633 = scmp.le.s32.totalorder 2, %s12
      // Predicated region
      $region37: #{tpu_custom_call.1} parent=5 // pred_check
        %p634 = pneg %p633
      $region38: #{tpu_custom_call.1} parent=5 // pred_check_branch
        %636 = sbr.rel (%p634) target = $region40
      $region39: #{tpu_custom_call.1} parent=5 // pred_region
        %s637 = ssub.s32 %s12, 2
        // Predicated region
        $region41: #{tpu_custom_call.1} parent=39 // pred_check
          %p638 = pneg %p114
        $region42: #{tpu_custom_call.1} parent=39 // pred_check_branch
          %640 = sbr.rel (%p638) target = $region44
        $region43: #{tpu_custom_call.1} parent=39 // pred_region
          %s641 = sand.u32 %s99, 1
          %s642 = scalar_lea.sflag [#allocation3], %s641
          %s643 = sand.u32 %s99, 1
          %s644 = smul.addr %s643, 64
          %s645 = scalar_lea.vmem [#allocation2], %s644
          %646 = dma.done %s642, 1024
        $region44: #{tpu_custom_call.1} parent=39 // pred_fallthru
          _
      $region40: #{tpu_custom_call.1} parent=5 // pred_fallthru
        _
    $region6: #{tpu_custom_call.1} parent=1 // loop_footer
      %s16 = sadd.s32 1, %s12
    $region7: #{tpu_custom_call.1} parent=1 // loop_footer_branch
      %11 = sbr.rel target = $region3
    $region8: #{tpu_custom_call.1} parent=1 // loop_exit
      _
    %647 = vsyncpa [#allocation3], 1
    %s648 = scalar_lea.sflag [#allocation3], 1
    %649 = vsyncpa %s648, 1

</llo_original>
